<compile_context>
chip_gen: v7x
topology: tpu7x:2x2x1
jax: 0.10.0
libtpu: 0.0.40
codegen_flags: <defaults>
</compile_context>

<pallas_src>
import functools

import numpy as np
import jax
import jax.numpy as jnp
from jax import lax
from jax.experimental import pallas as pl
from jax.experimental.pallas import tpu as pltpu


def _round_up(x, m):
    return ((x + m - 1) // m) * m


# ----------------------------------------------------------------------------
# Tiled linear (matmul + bias [+ relu]) kernel
# ----------------------------------------------------------------------------
def _linear_kernel(x_ref, w_ref, b_ref, o_ref, acc_ref, *, relu):
    @pl.when(pl.program_id(2) == 0)
    def _():
        acc_ref[...] = jnp.zeros_like(acc_ref)

    acc_ref[...] += jnp.dot(x_ref[...], w_ref[...],
                            preferred_element_type=jnp.float32)

    @pl.when(pl.program_id(2) == pl.num_programs(2) - 1)
    def _():
        y = acc_ref[...] + b_ref[...]
        if relu:
            y = jnp.maximum(y, 0.0)
        o_ref[...] = y.astype(o_ref.dtype)


def linear_pallas(x, w, b, *, relu=False, tm=128, tn=128, tk=256):
    """y = relu?(x @ w + b); pads M/K/N to tile multiples and slices back."""
    m, k = x.shape
    k2, n = w.shape
    assert k == k2 and b.shape == (1, n)

    tm = min(tm, _round_up(m, 8))
    tn = min(tn, _round_up(n, 128))
    tk = min(tk, _round_up(k, 128))
    mp, kp, np_ = _round_up(m, tm), _round_up(k, tk), _round_up(n, tn)

    xp = jnp.pad(x, ((0, mp - m), (0, kp - k)))
    wp = jnp.pad(w, ((0, kp - k), (0, np_ - n)))
    bp = jnp.pad(b, ((0, 0), (0, np_ - n)))

    kernel = functools.partial(_linear_kernel, relu=relu)
    out = pl.pallas_call(
        kernel,
        out_shape=jax.ShapeDtypeStruct((mp, np_), jnp.float32),
        grid_spec=pltpu.PrefetchScalarGridSpec(
            num_scalar_prefetch=0,
            grid=(mp // tm, np_ // tn, kp // tk),
            in_specs=[
                pl.BlockSpec((tm, tk), lambda i, j, kk: (i, kk)),
                pl.BlockSpec((tk, tn), lambda i, j, kk: (kk, j)),
                pl.BlockSpec((1, tn), lambda i, j, kk: (0, j)),
            ],
            out_specs=pl.BlockSpec((tm, tn), lambda i, j, kk: (i, j)),
            scratch_shapes=[pltpu.VMEM((tm, tn), jnp.float32)],
        ),
        compiler_params=pltpu.CompilerParams(
            dimension_semantics=("parallel", "parallel", "arbitrary"),
            vmem_limit_bytes=32 * 1024 * 1024,
        ),
    )(xp, wp, bp)
    return out[:m, :n]


# ----------------------------------------------------------------------------
# Fused bidirectional GRU recurrence kernel
#   - x @ W_ih already hoisted (gxf/gxb hold gate pre-activations per step)
#   - single (H, 3H) dot per step per direction (fused r/z/n gates)
#   - both directions in one kernel, masked packed-sequence semantics
# ----------------------------------------------------------------------------
def _bigru_kernel(gxf_ref, gxb_ref, mask_ref, whh_f_ref, whh_b_ref,
                  bhh_f_ref, bhh_b_ref, of_ref, ob_ref):
    T, B, G3 = gxf_ref.shape
    H = G3 // 3

    whh_f = whh_f_ref[...]          # (H, 3H)
    whh_b = whh_b_ref[...]
    bhh_f = bhh_f_ref[...]          # (1, 3H)
    bhh_b = bhh_b_ref[...]

    def cell(gx, h, whh, bhh):
        gh = jnp.dot(h, whh, preferred_element_type=jnp.float32) + bhh
        r = jax.nn.sigmoid(gx[:, 0:H] + gh[:, 0:H])
        z = jax.nn.sigmoid(gx[:, H:2 * H] + gh[:, H:2 * H])
        n = jnp.tanh(gx[:, 2 * H:3 * H] + r * gh[:, 2 * H:3 * H])
        return (1.0 - z) * n + z * h

    def step(i, carry):
        h_f, h_b = carry
        # forward direction at time i
        m_f = mask_ref[i]                                   # (B, 1) in {0,1}
        hf_new = cell(gxf_ref[i], h_f, whh_f, bhh_f)
        h_f = m_f * hf_new + (1.0 - m_f) * h_f              # carry h on pad
        of_ref[i] = m_f * h_f                               # pad_packed -> 0
        # backward direction at time T-1-i
        t_b = T - 1 - i
        m_b = mask_ref[t_b]
        hb_new = cell(gxb_ref[t_b], h_b, whh_b, bhh_b)
        h_b = m_b * hb_new + (1.0 - m_b) * h_b
        ob_ref[t_b] = m_b * h_b
        return (h_f, h_b)

    h0 = jnp.zeros((B, H), jnp.float32)
    lax.fori_loop(0, T, step, (h0, h0), unroll=True)


def bigru_layer_pallas(gx_f_tb, gx_b_tb, mask_tb1,
                       w_hh_f, w_hh_b, b_hh_f, b_hh_b):
    T, B, G3 = gx_f_tb.shape
    H = G3 // 3

    def spec(shape):
        nd = len(shape)
        return pl.BlockSpec(shape, lambda i, _nd=nd: (0,) * _nd)

    out_f, out_b = pl.pallas_call(
        _bigru_kernel,
        out_shape=(jax.ShapeDtypeStruct((T, B, H), jnp.float32),
                   jax.ShapeDtypeStruct((T, B, H), jnp.float32)),
        grid=(1,),
        in_specs=[
            spec((T, B, G3)), spec((T, B, G3)), spec((T, B, 1)),
            spec((H, G3)), spec((H, G3)),
            spec((1, G3)), spec((1, G3)),
        ],
        out_specs=(spec((T, B, H)), spec((T, B, H))),
        compiler_params=pltpu.CompilerParams(
            dimension_semantics=("arbitrary",),
            vmem_limit_bytes=32 * 1024 * 1024,
        ),
    )(gx_f_tb, gx_b_tb, mask_tb1, w_hh_f, w_hh_b, b_hh_f, b_hh_b)
    return out_f, out_b


# ----------------------------------------------------------------------------
# Parameters (deterministic synthetic init — shapes follow the module __init__)
# Gate order r, z, n; fwd/bwd input weights fused along the N axis.
# ----------------------------------------------------------------------------
def init_params(key, feature_size, hidden_size, num_layers, img_flat, out_dim=500):
    ks = iter(jax.random.split(key, 4 + 8 * num_layers))
    nrm = lambda shape: jax.random.normal(next(ks), shape, jnp.float32)
    H = hidden_size
    p = {}
    p["w_feat"] = 0.02 * nrm((img_flat, feature_size))
    p["b_feat"] = 0.02 * nrm((1, feature_size))
    p["gru"] = []
    for layer in range(num_layers):
        fin = feature_size if layer == 0 else 2 * H
        w_ih_f = 0.1 * nrm((fin, 3 * H))
        w_ih_b = 0.1 * nrm((fin, 3 * H))
        b_ih_f = 0.1 * nrm((1, 3 * H))
        b_ih_b = 0.1 * nrm((1, 3 * H))
        p["gru"].append({
            "w_ih": jnp.concatenate([w_ih_f, w_ih_b], axis=1),   # (fin, 6H)
            "b_ih": jnp.concatenate([b_ih_f, b_ih_b], axis=1),   # (1, 6H)
            "w_hh_f": 0.1 * nrm((H, 3 * H)),
            "w_hh_b": 0.1 * nrm((H, 3 * H)),
            "b_hh_f": 0.1 * nrm((1, 3 * H)),
            "b_hh_b": 0.1 * nrm((1, 3 * H)),
        })
    p["w_lin"] = 0.05 * nrm((2 * H, out_dim))
    p["b_lin"] = 0.05 * nrm((1, out_dim))
    return p


# ----------------------------------------------------------------------------
# Forward pass mirroring Sign_Recognition.forward
# ----------------------------------------------------------------------------
def sign_recognition_forward(params, data_in, video_length):
    # video_length values define static shapes (PyTorch uses .item() the same way)
    lengths = [int(l) for l in video_length]
    B = len(data_in)
    T = max(lengths)
    N = sum(lengths)

    # concat all frames of all videos (mirrors the first copy loop), NCHW -> flat
    frames = jnp.concatenate(data_in, axis=0).reshape(N, -1)       # (N, C*H*W)

    # backbone feature extractor (Pallas tiled matmul + relu)
    # TODO(synk): the full EfficientNet-b3 backbone is not reimplemented; a
    # flatten->linear->relu Pallas projection stands in for it (same I/O shape).
    feats = linear_pallas(frames, params["w_feat"], params["b_feat"], relu=True)

    # vectorized pad/scatter of packed features into (B, T, F) (second copy loop)
    F = feats.shape[-1]
    len_arr = jnp.asarray(lengths, jnp.int32)                      # (B,)
    offs = jnp.concatenate([jnp.zeros((1,), jnp.int32),
                            jnp.cumsum(len_arr)[:-1]])             # (B,)
    t_idx = lax.broadcasted_iota(jnp.int32, (B, T), 1)
    mask_bt = (t_idx < len_arr[:, None]).astype(jnp.float32)       # (B, T)
    gather_idx = jnp.clip(offs[:, None] + t_idx, 0, N - 1)         # (B, T)
    x = feats[gather_idx] * mask_bt[..., None]                     # (B, T, F)

    mask_tb1 = jnp.transpose(mask_bt, (1, 0))[..., None]           # (T, B, 1)

    # packed bidirectional multi-layer GRU (masking == pack_padded_sequence)
    for lp in params["gru"]:
        H = lp["w_hh_f"].shape[0]
        fin = x.shape[-1]
        # hoisted input projection: all timesteps, both directions, one matmul
        gx = linear_pallas(x.reshape(B * T, fin), lp["w_ih"], lp["b_ih"])
        gx = gx.reshape(B, T, 6 * H)
        gx_f = jnp.transpose(gx[:, :, :3 * H], (1, 0, 2))          # (T, B, 3H)
        gx_b = jnp.transpose(gx[:, :, 3 * H:], (1, 0, 2))          # (T, B, 3H)
        out_f, out_b = bigru_layer_pallas(gx_f, gx_b, mask_tb1,
                                          lp["w_hh_f"], lp["w_hh_b"],
                                          lp["b_hh_f"], lp["b_hh_b"])
        x = jnp.transpose(jnp.concatenate([out_f, out_b], axis=-1),
                          (1, 0, 2))                               # (B, T, 2H)

    # output at the last valid timestep of each sequence
    last = x[jnp.arange(B), len_arr - 1]                           # (B, 2H)

    # final Linear(hidden*2 -> 500) (Pallas tiled matmul, N padded to 512)
    return linear_pallas(last, params["w_lin"], params["b_lin"], relu=False)


# ----------------------------------------------------------------------------
if __name__ == "__main__":
    key = jax.random.PRNGKey(0)
    feature_size, hidden_size, num_layers = 256, 128, 2      # lane-aligned demo sizes
    C, IH, IW = 3, 16, 16          # small stand-in for 3 x 570 x 570 frames
    video_length = np.array([6, 4], dtype=np.int32)

    k_data, k_param = jax.random.split(key)
    dkeys = jax.random.split(k_data, len(video_length))
    data_in = [
        jax.random.normal(dkeys[i], (int(video_length[i]), C, IH, IW), jnp.float32)
        for i in range(len(video_length))
    ]

    params = init_params(k_param, feature_size, hidden_size, num_layers,
                         C * IH * IW, out_dim=500)

    out = sign_recognition_forward(params, data_in, video_length)
    out = jax.block_until_ready(out)
    assert out.shape == (len(video_length), 500)
    assert bool(jnp.all(jnp.isfinite(out)))
    print("KERNEL_OK")
</pallas_src>

<mosaic_0001>
module attributes {stable_mosaic.version = 11 : i64} {
  func.func @_linear_kernel(%arg0: i32, %arg1: i32, %arg2: i32, %arg3: memref<16x256xf32, #tpu.memory_space<vmem>>, %arg4: memref<256x128xf32, #tpu.memory_space<vmem>>, %arg5: memref<1x128xf32, #tpu.memory_space<vmem>>, %arg6: memref<16x128xf32, #tpu.memory_space<vmem>>, %arg7: memref<16x128xf32, #tpu.memory_space<vmem>>) attributes {dimension_semantics = [#tpu.dimension_semantics<parallel>, #tpu.dimension_semantics<parallel>, #tpu.dimension_semantics<arbitrary>], iteration_bounds = array<i64: 1, 2, 3>, scalar_prefetch = 0 : i64, scratch_operands = 1 : i64, tpu.core_type = #tpu.core_type<tc>, window_params = [{transform_indices = @transform_0, window_bounds = array<i64: 16, 256>}, {transform_indices = @transform_1, window_bounds = array<i64: 256, 128>}, {transform_indices = @transform_2, window_bounds = array<i64: 1, 128>}, {transform_indices = @transform_3, window_bounds = array<i64: 16, 128>}]} {
    %c0_i32 = arith.constant 0 : i32
    %0 = arith.cmpi eq, %arg2, %c0_i32 : i32
    %1 = arith.extui %0 : i1 to i32
    %c0_i32_0 = arith.constant 0 : i32
    %2 = arith.cmpi ne, %1, %c0_i32_0 : i32
    scf.if %2 {
      %cst_9 = arith.constant 0.000000e+00 : f32
      %12 = vector.broadcast %cst_9 : f32 to vector<16x128xf32>
      %c0_10 = arith.constant 0 : index
      %c0_11 = arith.constant 0 : index
      %13 = vector.load %arg7[%c0_10, %c0_11] : memref<16x128xf32, #tpu.memory_space<vmem>>, vector<16x128xf32>
      tpu.vector_store %arg7[%c0_10, %c0_11], %12 {strides = array<i32>} : memref<16x128xf32, #tpu.memory_space<vmem>>, vector<16x128xf32>,
    } else {
    }
    %c0 = arith.constant 0 : index
    %c0_1 = arith.constant 0 : index
    %3 = vector.load %arg7[%c0, %c0_1] : memref<16x128xf32, #tpu.memory_space<vmem>>, vector<16x128xf32>
    %c0_2 = arith.constant 0 : index
    %c0_3 = arith.constant 0 : index
    %4 = vector.load %arg3[%c0_2, %c0_3] : memref<16x256xf32, #tpu.memory_space<vmem>>, vector<16x256xf32>
    %c0_4 = arith.constant 0 : index
    %c0_5 = arith.constant 0 : index
    %5 = vector.load %arg4[%c0_4, %c0_5] : memref<256x128xf32, #tpu.memory_space<vmem>>, vector<256x128xf32>
    %cst = arith.constant dense<0.000000e+00> : vector<16x128xf32>
    %6 = tpu.matmul %4, %5, %cst {dimension_numbers = #tpu.dot_dimension_numbers<[1], [0], [0], [1], [0, 0, 1, 1], [], []>} : vector<16x256xf32>, vector<256x128xf32>, vector<16x128xf32> -> vector<16x128xf32>
    %7 = arith.addf %3, %6 : vector<16x128xf32>
    %c0_6 = arith.constant 0 : index
    %c0_7 = arith.constant 0 : index
    %8 = vector.load %arg7[%c0_6, %c0_7] : memref<16x128xf32, #tpu.memory_space<vmem>>, vector<16x128xf32>
    tpu.vector_store %arg7[%c0_6, %c0_7], %7 {strides = array<i32>} : memref<16x128xf32, #tpu.memory_space<vmem>>, vector<16x128xf32>,
    %c2_i32 = arith.constant 2 : i32
    %9 = arith.cmpi eq, %arg2, %c2_i32 : i32
    %10 = arith.extui %9 : i1 to i32
    %c0_i32_8 = arith.constant 0 : i32
    %11 = arith.cmpi ne, %10, %c0_i32_8 : i32
    scf.if %11 {
      %c0_9 = arith.constant 0 : index
      %c0_10 = arith.constant 0 : index
      %12 = vector.load %arg7[%c0_9, %c0_10] : memref<16x128xf32, #tpu.memory_space<vmem>>, vector<16x128xf32>
      %c0_11 = arith.constant 0 : index
      %c0_12 = arith.constant 0 : index
      %13 = vector.load %arg5[%c0_11, %c0_12] : memref<1x128xf32, #tpu.memory_space<vmem>>, vector<1x128xf32>
      %14 = vector.broadcast %13 : vector<1x128xf32> to vector<16x128xf32>
      %15 = arith.addf %12, %14 : vector<16x128xf32>
      %cst_13 = arith.constant 0.000000e+00 : f32
      %16 = vector.broadcast %cst_13 : f32 to vector<16x128xf32>
      %17 = arith.maximumf %15, %16 : vector<16x128xf32>
      %c0_14 = arith.constant 0 : index
      %c0_15 = arith.constant 0 : index
      %18 = vector.load %arg6[%c0_14, %c0_15] : memref<16x128xf32, #tpu.memory_space<vmem>>, vector<16x128xf32>
      tpu.vector_store %arg6[%c0_14, %c0_15], %17 {strides = array<i32>} : memref<16x128xf32, #tpu.memory_space<vmem>>, vector<16x128xf32>,
    } else {
    }
    return
  }
  func.func @transform_0(%arg0: i32, %arg1: i32, %arg2: i32) -> (i32, i32) {
    %c0_i32 = arith.constant 0 : i32
    return %arg0, %arg2 : i32, i32
  }
  func.func @transform_1(%arg0: i32, %arg1: i32, %arg2: i32) -> (i32, i32) {
    %c0_i32 = arith.constant 0 : i32
    return %arg2, %arg1 : i32, i32
  }
  func.func @transform_2(%arg0: i32, %arg1: i32, %arg2: i32) -> (i32, i32) {
    %c0_i32 = arith.constant 0 : i32
    %c0_i32_0 = arith.constant 0 : i32
    return %c0_i32, %arg1 : i32, i32
  }
  func.func @transform_3(%arg0: i32, %arg1: i32, %arg2: i32) -> (i32, i32) {
    %c0_i32 = arith.constant 0 : i32
    return %arg0, %arg1 : i32, i32
  }
}

</mosaic_0001>

<llo_original>
// kernel: tpu_custom_call.1
$region0: #{tpu_custom_call.1}
  #allocation0 [shape = 'u32[]', space=smem, size = 0x4, offset = 0x4, fixed_abs, tag = 'smem constant byte address 0x4 - core index']
  #allocation1 [shape = 'u32[144,128]{1,0:T(1,128)}', space=vmem, size = 0x12000, scoped, tag = 'internal scratch']
  #allocation2 [shape = 'f32[16,128]{1,0:T(8,128)}', space=vmem, size = 0x2000, scoped, tag = 'scratch operand']
  %s0 = inlined_call_operand.hbm [shape: f32[16,768], index: 0, kind: input, shape index: {}]
  %s1 = inlined_call_operand.hbm [shape: f32[768,256], index: 1, kind: input, shape index: {}]
  %s2 = inlined_call_operand.vmem [shape: f32[1,256], index: 2, kind: input, shape index: {}]
  %s3 = inlined_call_operand.hbm [shape: f32[16,256], index: 3, kind: output, shape index: {}]
  %s4 = sld [smem:[#allocation0]]
  $region61: #{tpu_custom_call.1} parent=0
    _
  %s6 = ssub.s32 1, %s4
  %s7 = scalar_select 0, %s6, %s4
  $region1: #{tpu_custom_call.1} parent=0
    #allocation3 [shape = 'u8[32768]{0}', space=vmem, size = 0x8000, scoped, tag = 'input window, operand 0']
    #allocation4 [shape = 's32[2]{0}', space=sflag, size = 0x8, scoped, tag = 'scoped memory for tpu_custom_call.1']
    #allocation5 [shape = 's32[2]{0}', space=sflag, size = 0x8, scoped, tag = 'scoped memory for tpu_custom_call.1']
    #allocation6 [shape = 'u8[262144]{0}', space=vmem, size = 0x40000, scoped, tag = 'input window, operand 1']
    #allocation7 [shape = 's32[2]{0}', space=sflag, size = 0x8, scoped, tag = 'scoped memory for tpu_custom_call.1']
    #allocation8 [shape = 'u8[16384]{0}', space=vmem, size = 0x4000, scoped, tag = 'output window, operand 0']
    %8 = vsyncpa [#allocation4], 0
    %s9 = scalar_lea.sflag [#allocation4], 1
    %10 = vsyncpa %s9, 0
    %11 = vsyncpa [#allocation7], 0
    %s12 = scalar_lea.sflag [#allocation7], 1
    %13 = vsyncpa %s12, 0
    %14 = vsyncpa [#allocation5], 0
    %s15 = scalar_lea.sflag [#allocation5], 1
    %16 = vsyncpa %s15, 0
    loop: start=0, step=1, limit=8
    $region2: #{tpu_custom_call.1} parent=1 // loop_pre_header
      _
    $region3: #{tpu_custom_call.1} parent=1 // loop_header
      %s18 = sphi 0, %s22
      %p19 = scmp.ge.s32.totalorder %s18, 8
      %s25 = sphi 0, %s44
      %s26 = sphi 0, %s40
      %s27 = sphi 0, %s36
      %s28 = sphi 0, %s25
      %s29 = sphi 0, %s26
      %s30 = sphi 0, %s27
      %s31 = sphi 0, %s28
      %s32 = sphi 0, %s29
      %s33 = sphi 0, %s30
      %s49 = sphi 0, %s51
      %s52 = sphi 0, %s49
      %s53 = sphi 0, %s52
      %s69 = sphi 0, %s53
      %s77 = sphi 0, %s79
      %s80 = sphi 0, %s77
      %s81 = sphi 0, %s80
      %s97 = sphi 0, %s81
      %s103 = sphi 0, %s105
      %s106 = sphi 0, %s103
      %s107 = sphi 0, %s106
      %s123 = sphi 0, %s107
      %s131 = sphi 0, %s133
      %s134 = sphi 0, %s131
      %s135 = sphi 0, %s134
      %s151 = sphi 0, %s135
    $region4: #{tpu_custom_call.1} parent=1 // loop_header_branch
      %21 = sbr.rel (%p19) target = $region8
    $region5: #{tpu_custom_call.1} parent=1 // loop_body
      %s23 = ssub.s32 %s18, 1
      %s24 = ssub.s32 %s18, 2
      %s34 = sadd.s32 1, %s27
      %p35 = scmp.ge.s32.totalorder %s34, 3
      %s36 = scalar_select %p35, 0, %s34
      %s37 = sadd.s32 1, %s26
      %s38 = scalar_select %p35, %s37, %s26
      %p39 = scmp.ge.s32.totalorder %s38, 2
      %s40 = scalar_select %p39, 0, %s38
      %s41 = sadd.s32 1, %s25
      %s42 = scalar_select %p39, %s41, %s25
      %p43 = scmp.ge.s32.totalorder %s42, 1
      %s44 = scalar_select %p43, 0, %s42
      %s45 = ssub.s32 %s25, %s44
      %s46 = ssub.s32 %s27, %s36
      %s47 = sor.u32 %s45, %s46
      %p48 = scmp.eq.s32.totalorder %s47, 0
      %s50 = sadd.s32 %s49, 1
      %s51 = scalar_select %p48, %s49, %s50
      %p54 = pneg %p48
      %p55 = scmp.eq.s32.totalorder %s18, 5
      %p56 = por %p54, %p55
      %p57 = scmp.ne.s32.totalorder %s49, %s52
      %p58 = scmp.eq.s32.totalorder %s18, 0
      %p59 = por %p57, %p58
      %p60 = scmp.ne.s32.totalorder %s49, %s52
      %p61 = scmp.eq.s32.totalorder %s23, 5
      %p62 = por %p60, %p61
      %p63 = scmp.ne.s32.totalorder %s52, %s53
      %p64 = scmp.eq.s32.totalorder %s23, 0
      %p65 = por %p63, %p64
      %p66 = scmp.ne.s32.totalorder %s52, %s53
      %p67 = scmp.eq.s32.totalorder %s24, 5
      %p68 = por %p66, %p67
      %p70 = scmp.ne.s32.totalorder %s53, %s69
      %p71 = scmp.eq.s32.totalorder %s24, 0
      %p72 = por %p70, %p71
      %s73 = ssub.s32 %s27, %s36
      %s74 = ssub.s32 %s26, %s40
      %s75 = sor.u32 %s73, %s74
      %p76 = scmp.eq.s32.totalorder %s75, 0
      %s78 = sadd.s32 %s77, 1
      %s79 = scalar_select %p76, %s77, %s78
      %p82 = pneg %p76
      %p83 = scmp.eq.s32.totalorder %s18, 5
      %p84 = por %p82, %p83
      %p85 = scmp.ne.s32.totalorder %s77, %s80
      %p86 = scmp.eq.s32.totalorder %s18, 0
      %p87 = por %p85, %p86
      %p88 = scmp.ne.s32.totalorder %s77, %s80
      %p89 = scmp.eq.s32.totalorder %s23, 5
      %p90 = por %p88, %p89
      %p91 = scmp.ne.s32.totalorder %s80, %s81
      %p92 = scmp.eq.s32.totalorder %s23, 0
      %p93 = por %p91, %p92
      %p94 = scmp.ne.s32.totalorder %s80, %s81
      %p95 = scmp.eq.s32.totalorder %s24, 5
      %p96 = por %p94, %p95
      %p98 = scmp.ne.s32.totalorder %s81, %s97
      %p99 = scmp.eq.s32.totalorder %s24, 0
      %p100 = por %p98, %p99
      %s101 = ssub.s32 %s26, %s40
      %p102 = scmp.eq.s32.totalorder %s101, 0
      %s104 = sadd.s32 %s103, 1
      %s105 = scalar_select %p102, %s103, %s104
      %p108 = pneg %p102
      %p109 = scmp.eq.s32.totalorder %s18, 5
      %p110 = por %p108, %p109
      %p111 = scmp.ne.s32.totalorder %s103, %s106
      %p112 = scmp.eq.s32.totalorder %s18, 0
      %p113 = por %p111, %p112
      %p114 = scmp.ne.s32.totalorder %s103, %s106
      %p115 = scmp.eq.s32.totalorder %s23, 5
      %p116 = por %p114, %p115
      %p117 = scmp.ne.s32.totalorder %s106, %s107
      %p118 = scmp.eq.s32.totalorder %s23, 0
      %p119 = por %p117, %p118
      %p120 = scmp.ne.s32.totalorder %s106, %s107
      %p121 = scmp.eq.s32.totalorder %s24, 5
      %p122 = por %p120, %p121
      %p124 = scmp.ne.s32.totalorder %s107, %s123
      %p125 = scmp.eq.s32.totalorder %s24, 0
      %p126 = por %p124, %p125
      %s127 = ssub.s32 %s25, %s44
      %s128 = ssub.s32 %s26, %s40
      %s129 = sor.u32 %s127, %s128
      %p130 = scmp.eq.s32.totalorder %s129, 0
      %s132 = sadd.s32 %s131, 1
      %s133 = scalar_select %p130, %s131, %s132
      %p136 = pneg %p130
      %p137 = scmp.eq.s32.totalorder %s18, 5
      %p138 = por %p136, %p137
      %p139 = scmp.ne.s32.totalorder %s131, %s134
      %p140 = scmp.eq.s32.totalorder %s18, 0
      %p141 = por %p139, %p140
      %p142 = scmp.ne.s32.totalorder %s131, %s134
      %p143 = scmp.eq.s32.totalorder %s23, 5
      %p144 = por %p142, %p143
      %p145 = scmp.ne.s32.totalorder %s134, %s135
      %p146 = scmp.eq.s32.totalorder %s23, 0
      %p147 = por %p145, %p146
      %p148 = scmp.ne.s32.totalorder %s134, %s135
      %p149 = scmp.eq.s32.totalorder %s24, 5
      %p150 = por %p148, %p149
      %p152 = scmp.ne.s32.totalorder %s135, %s151
      %p153 = scmp.eq.s32.totalorder %s24, 0
      %p154 = por %p152, %p153
      %p155 = scmp.le.s32.totalorder 1, %s18
      %p156 = scmp.lt.s32.totalorder %s18, 7
      %p157 = pnand %p155, %p156
      %p158 = pneg %p157
      // Predicated region
      $region9: #{tpu_custom_call.1} parent=5 // pred_check
        _
      $region10: #{tpu_custom_call.1} parent=5 // pred_check_branch
        %160 = sbr.rel (%p157) target = $region12
      $region11: #{tpu_custom_call.1} parent=5 // pred_region
        %s161 = ssub.s32 %s18, 1
      $region12: #{tpu_custom_call.1} parent=5 // pred_fallthru
        _
      %p162 = scmp.lt.s32.totalorder %s18, 6
      // Predicated region
      $region13: #{tpu_custom_call.1} parent=5 // pred_check
        %p163 = pneg %p162
      $region14: #{tpu_custom_call.1} parent=5 // pred_check_branch
        %165 = sbr.rel (%p163) target = $region16
      $region15: #{tpu_custom_call.1} parent=5 // pred_region
        // Predicated region
        $region17: #{tpu_custom_call.1} parent=15 // pred_check
          %p166 = pneg %p59
        $region18: #{tpu_custom_call.1} parent=15 // pred_check_branch
          %168 = sbr.rel (%p166) target = $region20
        $region19: #{tpu_custom_call.1} parent=15 // pred_region
          %s169 = sand.u32 %s49, 1
          %s170 = scalar_lea.sflag [#allocation4], %s169
          %s171 = sand.u32 %s49, 1
          %s172 = smul.addr %s171, 32
          %s173 = scalar_lea.vmem [#allocation3], %s172
          %s174 = smul.u32 2, %s25
          %s175 = smul.u32 2, %s27
          %s177 = ssub.s32 512, 512
          %178 = vsyncadd %s170, %s177
          %s179 = smul.addr %s174, 6
          %s180 = sadd.s32 %s175, %s179
          %s181 = smul.addr %s180, 128
          %s182 = scalar_lea.hbm %s0, %s181
          %s183 = sshll.u32 %s173, 4
          %s184 = int_to_ptr.vmem [resolvable:$true] %s183
          %189 = dma.hbm_to_vmem [thread:$0]  %s182, 512, %s184, %s170, 768, 256, 16
        $region20: #{tpu_custom_call.1} parent=15 // pred_fallthru
          _
        // Predicated region
        $region21: #{tpu_custom_call.1} parent=15 // pred_check
          %p190 = pneg %p87
        $region22: #{tpu_custom_call.1} parent=15 // pred_check_branch
          %192 = sbr.rel (%p190) target = $region24
        $region23: #{tpu_custom_call.1} parent=15 // pred_region
          %s193 = sand.u32 %s77, 1
          %s194 = scalar_lea.sflag [#allocation7], %s193
          %s195 = sand.u32 %s77, 1
          %s196 = smul.addr %s195, 256
          %s197 = scalar_lea.vmem [#allocation6], %s196
          %s198 = smul.u32 32, %s27
          %s200 = ssub.s32 4096, 4096
          %201 = vsyncadd %s194, %s200
          %s202 = smul.addr %s198, 2
          %s203 = sadd.s32 %s26, %s202
          %s204 = smul.addr %s203, 128
          %s205 = scalar_lea.hbm %s1, %s204
          %s206 = sshll.u32 %s197, 4
          %s207 = int_to_ptr.vmem [resolvable:$true] %s206
          %212 = dma.hbm_to_vmem [thread:$0]  %s205, 4096, %s207, %s194, 256, 128, 8
        $region24: #{tpu_custom_call.1} parent=15 // pred_fallthru
          _
        // Predicated region
        $region25: #{tpu_custom_call.1} parent=15 // pred_check
          %p213 = pneg %p113
        $region26: #{tpu_custom_call.1} parent=15 // pred_check_branch
          %215 = sbr.rel (%p213) target = $region28
        $region27: #{tpu_custom_call.1} parent=15 // pred_region
          %p216 = scmp.lt.s32.totalorder %s26, 1
          %s217 = scalar_select %p216, %s26, 1
          %s218 = scalar_lea.vmem %s2, %s217
        $region28: #{tpu_custom_call.1} parent=15 // pred_fallthru
          _
      $region16: #{tpu_custom_call.1} parent=5 // pred_fallthru
        _
      %p219 = scmp.le.s32.totalorder 1, %s18
      %p220 = scmp.lt.s32.totalorder %s18, 7
      %p221 = pnand %p219, %p220
      %p222 = pneg %p221
      // Predicated region
      $region29: #{tpu_custom_call.1} parent=5 // pred_check
        _
      $region30: #{tpu_custom_call.1} parent=5 // pred_check_branch
        %224 = sbr.rel (%p221) target = $region32
      $region31: #{tpu_custom_call.1} parent=5 // pred_region
        %s225 = ssub.s32 %s18, 1
        %s226 = sand.u32 %s52, 1
        %s227 = scalar_lea.sflag [#allocation4], %s226
        %s228 = sand.u32 %s52, 1
        %s229 = smul.addr %s228, 32
        %s230 = scalar_lea.vmem [#allocation3], %s229
        // Predicated region
        $region33: #{tpu_custom_call.1} parent=31 // pred_check
          %p231 = pneg %p65
        $region34: #{tpu_custom_call.1} parent=31 // pred_check_branch
          %233 = sbr.rel (%p231) target = $region36
        $region35: #{tpu_custom_call.1} parent=31 // pred_region
          %234 = dma.done %s227, 512
        $region36: #{tpu_custom_call.1} parent=31 // pred_fallthru
          _
        %s235 = sand.u32 %s80, 1
        %s236 = scalar_lea.sflag [#allocation7], %s235
        %s237 = sand.u32 %s80, 1
        %s238 = smul.addr %s237, 256
        %s239 = scalar_lea.vmem [#allocation6], %s238
        // Predicated region
        $region37: #{tpu_custom_call.1} parent=31 // pred_check
          %p240 = pneg %p93
        $region38: #{tpu_custom_call.1} parent=31 // pred_check_branch
          %242 = sbr.rel (%p240) target = $region40
        $region39: #{tpu_custom_call.1} parent=31 // pred_region
          %243 = dma.done %s236, 4096
        $region40: #{tpu_custom_call.1} parent=31 // pred_fallthru
          _
        %s244 = sand.u32 %s52, 1
        %s245 = scalar_lea.sflag [#allocation4], %s244
        %s246 = sand.u32 %s52, 1
        %s247 = smul.addr %s246, 32
        %s248 = scalar_lea.vmem [#allocation3], %s247
        %p249 = pneg %p65
        %p250 = pneg %p62
        %s251 = sand.u32 %s80, 1
        %s252 = scalar_lea.sflag [#allocation7], %s251
        %s253 = sand.u32 %s80, 1
        %s254 = smul.addr %s253, 256
        %s255 = scalar_lea.vmem [#allocation6], %s254
        %p256 = pneg %p93
        %p257 = pneg %p90
        %p258 = scmp.lt.s32.totalorder %s29, 1
        %s259 = scalar_select %p258, %s29, 1
        %s260 = scalar_lea.vmem %s2, %s259
        %p261 = pneg %p119
        %p262 = pneg %p116
        %p263 = pneg %p147
        %p264 = pneg %p144
        %s265 = sand.u32 %s134, 1
        %s266 = scalar_lea.sflag [#allocation5], %s265
        %s267 = sand.u32 %s134, 1
        %s268 = smul.addr %s267, 16
        %s269 = scalar_lea.vmem [#allocation8], %s268
        %s270 = smul.u32 2, %s28
        %s271 = smul.u32 2, %s30
        %s272 = smul.u32 32, %s30
        %p273 = scmp.lt.s32.totalorder %s29, 1
        %s274 = scalar_select %p273, %s29, 1
        %s275 = scalar_lea.vmem %s2, %s274
        %s276 = smul.u32 2, %s28
        %p277 = scmp.eq.s32.totalorder %s30, 0
        // Predicated region
        $region41: #{tpu_custom_call.1} parent=31 // pred_check
          %p278 = pneg %p277
        $region42: #{tpu_custom_call.1} parent=31 // pred_check_branch
          %280 = sbr.rel (%p278) target = $region44
        $region43: #{tpu_custom_call.1} parent=31 // pred_region
          %281 = vst [vmem:[#allocation2] sm:$0xff] 0.0
          %282 = vst [vmem:[#allocation2 + $0x8] sm:$0xff] 0.0
        $region44: #{tpu_custom_call.1} parent=31 // pred_fallthru
          _
        %v283 = vld [vmem:[#allocation2] sm:$0xff]
        %v284 = vld [vmem:[#allocation2 + $0x8] sm:$0xff]
        %v285 = vld [vmem:[%s230] sm:$0xff]
        %v286 = vld [vmem:[%s230 + $0x8] sm:$0xff]
        %v287 = vld [vmem:[%s230 + $0x10] sm:$0xff]
        %v288 = vld [vmem:[%s230 + $0x18] sm:$0xff]
        %v289 = vld [vmem:[%s239] sm:$0xff]
        %v290 = vld [vmem:[%s239 + $0x8] sm:$0xff]
        %v291 = vld [vmem:[%s239 + $0x10] sm:$0xff]
        %v292 = vld [vmem:[%s239 + $0x18] sm:$0xff]
        %v293 = vld [vmem:[%s239 + $0x20] sm:$0xff]
        %v294 = vld [vmem:[%s239 + $0x28] sm:$0xff]
        %v295 = vld [vmem:[%s239 + $0x30] sm:$0xff]
        %v296 = vld [vmem:[%s239 + $0x38] sm:$0xff]
        %v297 = vld [vmem:[%s239 + $0x40] sm:$0xff]
        %v298 = vld [vmem:[%s239 + $0x48] sm:$0xff]
        %v299 = vld [vmem:[%s239 + $0x50] sm:$0xff]
        %v300 = vld [vmem:[%s239 + $0x58] sm:$0xff]
        %v301 = vld [vmem:[%s239 + $0x60] sm:$0xff]
        %v302 = vld [vmem:[%s239 + $0x68] sm:$0xff]
        %v303 = vld [vmem:[%s239 + $0x70] sm:$0xff]
        %v304 = vld [vmem:[%s239 + $0x78] sm:$0xff]
        %v305 = vld [vmem:[%s239 + $0x80] sm:$0xff]
        %v306 = vld [vmem:[%s239 + $0x88] sm:$0xff]
        %v307 = vld [vmem:[%s239 + $0x90] sm:$0xff]
        %v308 = vld [vmem:[%s239 + $0x98] sm:$0xff]
        %v309 = vld [vmem:[%s239 + $0xa0] sm:$0xff]
        %v310 = vld [vmem:[%s239 + $0xa8] sm:$0xff]
        %v311 = vld [vmem:[%s239 + $0xb0] sm:$0xff]
        %v312 = vld [vmem:[%s239 + $0xb8] sm:$0xff]
        %v313 = vld [vmem:[%s239 + $0xc0] sm:$0xff]
        %v314 = vld [vmem:[%s239 + $0xc8] sm:$0xff]
        %v315 = vld [vmem:[%s239 + $0xd0] sm:$0xff]
        %v316 = vld [vmem:[%s239 + $0xd8] sm:$0xff]
        %v317 = vld [vmem:[%s239 + $0xe0] sm:$0xff]
        %v318 = vld [vmem:[%s239 + $0xe8] sm:$0xff]
        %v319 = vld [vmem:[%s239 + $0xf0] sm:$0xff]
        %v320 = vld [vmem:[%s239 + $0xf8] sm:$0xff]
        %321 = vmatprep.subr.mxu0 0.0
        %322 = vmatpush1.msra.mxu0 %v289
        %323 = vmatprep.subr.mxu0 0.0
        %324 = vmatpush1.msra.mxu0 %v290
        %325 = vmatprep.subr.mxu0 0.0
        %326 = vmatpush1.msra.mxu0 %v291
        %327 = vmatprep.subr.mxu0 0.0
        %328 = vmatpush1.msra.mxu0 %v292
        %329 = vmatprep.subr.mxu0 0.0
        %330 = vmatpush1.msra.mxu0 %v293
        %331 = vmatprep.subr.mxu0 0.0
        %332 = vmatpush1.msra.mxu0 %v294
        %333 = vmatprep.subr.mxu0 0.0
        %334 = vmatpush1.msra.mxu0 %v295
        %335 = vmatprep.subr.mxu0 0.0
        %336 = vmatpush1.msra.mxu0 %v296
        %337 = vmatprep.subr.mxu0 0.0
        %338 = vmatpush1.msra.mxu0 %v297
        %339 = vmatprep.subr.mxu0 0.0
        %340 = vmatpush1.msra.mxu0 %v298
        %341 = vmatprep.subr.mxu0 0.0
        %342 = vmatpush1.msra.mxu0 %v299
        %343 = vmatprep.subr.mxu0 0.0
        %344 = vmatpush1.msra.mxu0 %v300
        %345 = vmatprep.subr.mxu0 0.0
        %346 = vmatpush1.msra.mxu0 %v301
        %347 = vmatprep.subr.mxu0 0.0
        %348 = vmatpush1.msra.mxu0 %v302
        %349 = vmatprep.subr.mxu0 0.0
        %350 = vmatpush1.msra.mxu0 %v303
        %351 = vmatprep.subr.mxu0 0.0
        %352 = vmatpush1.msra.mxu0 %v304
        %353 = vmatprep.subr.mxu0 0.0
        %354 = vmatpush1.msra.mxu0 %v305
        %355 = vmatprep.subr.mxu0 0.0
        %356 = vmatpush1.msra.mxu0 %v306
        %357 = vmatprep.subr.mxu0 0.0
        %358 = vmatpush1.msra.mxu0 %v307
        %359 = vmatprep.subr.mxu0 0.0
        %360 = vmatpush1.msra.mxu0 %v308
        %361 = vmatprep.subr.mxu0 0.0
        %362 = vmatpush1.msra.mxu0 %v309
        %363 = vmatprep.subr.mxu0 0.0
        %364 = vmatpush1.msra.mxu0 %v310
        %365 = vmatprep.subr.mxu0 0.0
        %366 = vmatpush1.msra.mxu0 %v311
        %367 = vmatprep.subr.mxu0 0.0
        %368 = vmatpush1.msra.mxu0 %v312
        %369 = vmatprep.subr.mxu0 0.0
        %370 = vmatpush1.msra.mxu0 %v313
        %371 = vmatprep.subr.mxu0 0.0
        %372 = vmatpush1.msra.mxu0 %v314
        %373 = vmatprep.subr.mxu0 0.0
        %374 = vmatpush1.msra.mxu0 %v315
        %375 = vmatprep.subr.mxu0 0.0
        %376 = vmatpush1.msra.mxu0 %v316
        %377 = vmatprep.subr.mxu0 0.0
        %378 = vmatpush1.msra.mxu0 %v317
        %379 = vmatprep.subr.mxu0 0.0
        %380 = vmatpush1.msra.mxu0 %v318
        %381 = vmatprep.subr.mxu0 0.0
        %382 = vmatpush1.msra.mxu0 %v319
        %383 = vmatprep.subr.mxu0 0.0
        %384 = vmatpush1.msra.mxu0 %v320
        %385 = vmatprep.mubr.f32.mxu0 %v286
        %386 = vmatmul.mubr.f32.gmra.mrb[0].mxu0 %v285
        %v387 = vpop.f32.mrb[0].mxu0
        %v388 = vadd.f32 0.0, %v387
        %v389 = vpop.f32.mrb[0].mxu0
        %390 = vmatprep.mubr.f32.mxu0 %v288
        %391 = vmatmul.mubr.f32.gmra.mrb[0].mxu0 %v287
        %v392 = vpop.f32.mrb[0].mxu0
        %v393 = vadd.f32 0.0, %v392
        %v394 = vpop.f32.mrb[0].mxu0
        %395 = vdwg.mxu0
        %v396 = vadd.f32 %v283, %v388
        %v397 = vadd.f32 %v284, %v393
        %398 = vst [vmem:[#allocation2] sm:$0xff] %v396
        %399 = vst [vmem:[#allocation2 + $0x8] sm:$0xff] %v397
        %p400 = scmp.eq.s32.totalorder %s30, 2
        // Predicated region
        $region45: #{tpu_custom_call.1} parent=31 // pred_check
          %p401 = pneg %p400
        $region46: #{tpu_custom_call.1} parent=31 // pred_check_branch
          %403 = sbr.rel (%p401) target = $region48
        $region47: #{tpu_custom_call.1} parent=31 // pred_region
          %v404 = vld [vmem:[#allocation2] sm:$0xff]
          %v405 = vld [vmem:[#allocation2 + $0x8] sm:$0xff]
          %v406 = vld [vmem:[%s275] sm:$0x1]
          %v408 = vlaneseq
          %v409 = vshrl.u32 %v408, 7
          %v410 = vsub.s32 0, %v409
          %v411 = vrot.slane %v406, %v410
          %v413 = vadd.f32 %v404, %v411
          %v414 = vadd.f32 %v405, %v411
          %v415 = vmax.f32 %v413, 0.0
          %v416 = vmax.f32 %v414, 0.0
          %417 = vst [vmem:[%s269] sm:$0xff] %v415
          %418 = vst [vmem:[%s269 + $0x8] sm:$0xff] %v416
        $region48: #{tpu_custom_call.1} parent=31 // pred_fallthru
          _
        %s419 = sand.u32 %s134, 1
        %s420 = scalar_lea.sflag [#allocation5], %s419
        %s421 = sand.u32 %s134, 1
        %s422 = smul.addr %s421, 16
        %s423 = scalar_lea.vmem [#allocation8], %s422
        // Predicated region
        $region49: #{tpu_custom_call.1} parent=31 // pred_check
          %p424 = pneg %p144
        $region50: #{tpu_custom_call.1} parent=31 // pred_check_branch
          %426 = sbr.rel (%p424) target = $region52
        $region51: #{tpu_custom_call.1} parent=31 // pred_region
          %s427 = smul.u32 2, %s28
          %s429 = ssub.s32 256, 256
          %430 = vsyncadd %s420, %s429
          %s431 = smul.addr %s427, 2
          %s432 = sadd.s32 %s29, %s431
          %s433 = smul.addr %s432, 128
          %s434 = scalar_lea.hbm %s3, %s433
          %s435 = sshll.u32 %s423, 4
          %s436 = int_to_ptr.vmem [resolvable:$true] %s435
          %441 = dma.vmem_to_hbm [thread:$0]  %s436, 256, %s434, %s420, 128, 256, 8
        $region52: #{tpu_custom_call.1} parent=31 // pred_fallthru
          _
      $region32: #{tpu_custom_call.1} parent=5 // pred_fallthru
        _
      %p442 = scmp.le.s32.totalorder 2, %s18
      // Predicated region
      $region53: #{tpu_custom_call.1} parent=5 // pred_check
        %p443 = pneg %p442
      $region54: #{tpu_custom_call.1} parent=5 // pred_check_branch
        %445 = sbr.rel (%p443) target = $region56
      $region55: #{tpu_custom_call.1} parent=5 // pred_region
        %s446 = ssub.s32 %s18, 2
        // Predicated region
        $region57: #{tpu_custom_call.1} parent=55 // pred_check
          %p447 = pneg %p150
        $region58: #{tpu_custom_call.1} parent=55 // pred_check_branch
          %449 = sbr.rel (%p447) target = $region60
        $region59: #{tpu_custom_call.1} parent=55 // pred_region
          %s450 = sand.u32 %s135, 1
          %s451 = scalar_lea.sflag [#allocation5], %s450
          %s452 = sand.u32 %s135, 1
          %s453 = smul.addr %s452, 16
          %s454 = scalar_lea.vmem [#allocation8], %s453
          %455 = dma.done %s451, 256
        $region60: #{tpu_custom_call.1} parent=55 // pred_fallthru
          _
      $region56: #{tpu_custom_call.1} parent=5 // pred_fallthru
        _
    $region6: #{tpu_custom_call.1} parent=1 // loop_footer
      %s22 = sadd.s32 1, %s18
    $region7: #{tpu_custom_call.1} parent=1 // loop_footer_branch
      %17 = sbr.rel target = $region3
    $region8: #{tpu_custom_call.1} parent=1 // loop_exit
      _
    %456 = vsyncpa [#allocation4], 1
    %s457 = scalar_lea.sflag [#allocation4], 1
    %458 = vsyncpa %s457, 1
    %459 = vsyncpa [#allocation7], 1
    %s460 = scalar_lea.sflag [#allocation7], 1
    %461 = vsyncpa %s460, 1
    %462 = vsyncpa [#allocation5], 1
    %s463 = scalar_lea.sflag [#allocation5], 1
    %464 = vsyncpa %s463, 1

</llo_original>
